<compile_context>
chip_gen: v7x
topology: tpu7x:2x2x1
jax: 0.10.0
libtpu: 0.0.40
codegen_flags: <defaults>
</compile_context>

<pallas_src>
import functools

import jax
import jax.numpy as jnp
from jax.experimental import pallas as pl
from jax.experimental.pallas import tpu as pltpu


def _cdiv(a, b):
    return -(-a // b)


def _round_up(a, b):
    return (a + b - 1) // b * b


def _sublane_pack(dtype):
    # Sublane packing factor per element size (f32:8, bf16:16, int8/bool:32).
    return {4: 8, 2: 16, 1: 32}.get(jnp.dtype(dtype).itemsize, 8)


def _budgets():
    """(max_tile_bytes, vmem_limit_bytes), generation-aware with a safe fallback."""
    tile_bytes, vmem_limit = 8 << 20, 40 << 20          # safe on v5e/v6e/v7x
    try:
        cap = pltpu.get_tpu_info().vmem_capacity_bytes
        if cap >= (96 << 20):                            # v5e/v6e: 128 MiB physical
            tile_bytes, vmem_limit = 16 << 20, 64 << 20
    except Exception:
        pass
    return tile_bytes, vmem_limit


def _lane_tile(hw, max_lanes):
    if hw <= max_lanes:
        return hw                                        # full extent: always legal
    return max(128, (max_lanes // 128) * 128)


def _choose_tiles(R, HW, itemsize, pack, max_tile_bytes):
    budget = max(pack * 128, max_tile_bytes // max(1, itemsize))   # elems / tile
    r_pad_full = _round_up(R, pack)
    roof_lanes = min(HW, 512)                            # ~85% of HBM roofline tile
    if r_pad_full * roof_lanes <= budget:
        # All rows resident; spend the rest of the budget on lanes.
        tile_r = R
        tile_hw = _lane_tile(HW, budget // r_pad_full)
    else:
        # Row-tile: roofline-sized lane tile first, then pack-aligned rows.
        tile_hw = _lane_tile(HW, max(128, budget // pack))
        rows = max(pack, (budget // tile_hw) // pack * pack)
        tile_r = R if rows >= R else rows
    return tile_r, tile_hw


def _maybe_split_for_megacore(R, HW, tile_r, tile_hw, itemsize, pack):
    """Guarantee >=2 grid points for non-trivial inputs so both TCs get work."""
    if _cdiv(R, tile_r) * _cdiv(HW, tile_hw) >= 2:
        return tile_r, tile_hw
    if R * HW * itemsize < (1 << 20):                    # too small to bother
        return tile_r, tile_hw
    if tile_hw >= 1024:
        return tile_r, _round_up(_cdiv(tile_hw, 2), 128)
    if tile_r >= 2 * pack:
        return max(pack, _round_up(_cdiv(tile_r, 2), pack)), tile_hw
    return tile_r, tile_hw


def _row_sums_kernel(x_ref, o_ref, *, hw, tile_hw, mask_tail):
    """Per-row sums of one (tile_r, tile_hw) tile of the flattened (B*C, HW) view."""
    x = x_ref[...].astype(jnp.float32)                   # in-kernel cast (no-op for f32)
    if mask_tail:                                        # static: only when HW % tile_hw != 0
        j = pl.program_id(1)
        col = jax.lax.broadcasted_iota(jnp.int32, x.shape, 1)
        x = jnp.where(col < hw - j * tile_hw, x, 0.0)
    o_ref[...] = jnp.sum(x, axis=-1, keepdims=True)      # (tile_r, 1) partial


def compute_channel_weights_batch(targets, *, max_tile_bytes=None, vmem_limit_bytes=None):
    """targets: (B, C, *spatial) binary tensor. Returns (C,) channel weights."""
    B, C = int(targets.shape[0]), int(targets.shape[1])
    HW = 1
    for d in targets.shape[2:]:
        HW *= int(d)
    R = B * C

    default_tile, default_limit = _budgets()
    if max_tile_bytes is None:
        max_tile_bytes = default_tile
    if vmem_limit_bytes is None:
        vmem_limit_bytes = default_limit

    # Free reshape: NCHW is already contiguous as (B*C, H*W). No transpose, no pad.
    flat = targets.reshape(R, HW)
    itemsize = jnp.dtype(flat.dtype).itemsize
    pack = _sublane_pack(flat.dtype)

    tile_r, tile_hw = _choose_tiles(R, HW, itemsize, pack, max_tile_bytes)
    tile_r, tile_hw = _maybe_split_for_megacore(R, HW, tile_r, tile_hw, itemsize, pack)

    n_i = _cdiv(R, tile_r)
    n_j = _cdiv(HW, tile_hw)
    r_pad = n_i * tile_r
    mask_tail = (HW % tile_hw) != 0

    kernel = functools.partial(
        _row_sums_kernel, hw=HW, tile_hw=tile_hw, mask_tail=mask_tail)

    out_bytes = n_j * r_pad * 4
    partials = pl.pallas_call(
        kernel,
        out_shape=jax.ShapeDtypeStruct((n_j, r_pad, 1), jnp.float32),
        grid=(n_i, n_j),
        in_specs=[pl.BlockSpec((tile_r, tile_hw), lambda i, j: (i, j))],
        # Distinct output block per grid point -> no accumulation, both axes parallel.
        out_specs=pl.BlockSpec((None, tile_r, 1), lambda i, j: (j, i, 0)),
        compiler_params=pltpu.CompilerParams(
            dimension_semantics=("parallel", "parallel"),
            vmem_limit_bytes=vmem_limit_bytes,
        ),
        cost_estimate=pl.CostEstimate(
            flops=R * HW,
            transcendentals=0,
            bytes_accessed=R * HW * itemsize + out_bytes,
        ),
    )(flat)

    # Tiny epilogue: drop padded garbage rows, reduce HW tiles + batch, normalize.
    # All-zero targets yield NaN, matching the PyTorch module (x / 0 sum).
    row_sums = jnp.sum(partials[:, :R, 0], axis=0)       # (R,) = (B*C,)
    per_channel = row_sums.reshape(B, C).sum(axis=0)     # (C,)
    return per_channel / per_channel.sum()


if __name__ == "__main__":
    def reference(t):
        C = t.shape[1]
        flat = jnp.moveaxis(t, 1, 0).reshape(C, -1).astype(jnp.float32)
        s = flat.sum(-1)
        return s / s.sum()

    # Case 1: module-sized example — single full-extent tile, grid (1, 1).
    B, C, H, W = 2, 4, 16, 16
    t1 = (jax.random.uniform(jax.random.PRNGKey(0), (B, C, H, W)) > 0.5).astype(jnp.float32)
    w1 = jax.block_until_ready(compute_channel_weights_batch(t1))
    r1 = reference(t1)
    assert w1.shape == (C,)
    assert jnp.allclose(w1, r1, atol=1e-6, rtol=1e-6), (w1, r1)
    assert jnp.allclose(w1.sum(), 1.0, atol=1e-6)

    # Case 2: tiny tile budget -> row tiling with a partial last row block
    # (R=15, tile_r=8) and a masked HW tail (480 % 128 != 0), multi-tile partials.
    t2 = (jax.random.uniform(jax.random.PRNGKey(1), (3, 5, 24, 20)) > 0.3).astype(jnp.float32)
    w2 = jax.block_until_ready(compute_channel_weights_batch(t2, max_tile_bytes=4096))
    r2 = reference(t2)
    assert jnp.allclose(w2, r2, atol=1e-6, rtol=1e-6), (w2, r2)

    # Case 3: bf16 pass-through (in-kernel cast; binary counts stay exact in f32).
    t3 = (jax.random.uniform(jax.random.PRNGKey(2), (2, 4, 16, 16)) > 0.5).astype(jnp.bfloat16)
    w3 = jax.block_until_ready(compute_channel_weights_batch(t3))
    r3 = reference(t3)
    assert jnp.allclose(w3, r3, atol=1e-6, rtol=1e-6), (w3, r3)

    print("KERNEL_OK")
</pallas_src>

<mosaic_0001>
module attributes {stable_mosaic.version = 11 : i64} {
  func.func @_row_sums_kernel(%arg0: i32, %arg1: i32, %arg2: memref<8x256xf32, #tpu.memory_space<vmem>>, %arg3: memref<1x8x1xf32, #tpu.memory_space<vmem>>) attributes {dimension_semantics = [#tpu.dimension_semantics<parallel>, #tpu.dimension_semantics<parallel>], iteration_bounds = array<i64: 1, 1>, scalar_prefetch = 0 : i64, scratch_operands = 0 : i64, tpu.core_type = #tpu.core_type<tc>, window_params = [{transform_indices = @transform_0, window_bounds = array<i64: 8, 256>}, {transform_indices = @transform_1, window_bounds = array<i64: 1, 8, 1>}]} {
    %c0 = arith.constant 0 : index
    %c0_0 = arith.constant 0 : index
    %0 = vector.load %arg2[%c0, %c0_0] : memref<8x256xf32, #tpu.memory_space<vmem>>, vector<8x256xf32>
    %cst = arith.constant dense<0.000000e+00> : vector<8xf32>
    %1 = vector.multi_reduction <add>, %0, %cst [1] : vector<8x256xf32> to vector<8xf32>
    %2 = vector.shape_cast %1 : vector<8xf32> to vector<8x1xf32>
    %c0_1 = arith.constant 0 : index
    %c0_2 = arith.constant 0 : index
    %c0_3 = arith.constant 0 : index
    %3 = vector.load %arg3[%c0_1, %c0_2, %c0_3] : memref<1x8x1xf32, #tpu.memory_space<vmem>>, vector<1x8x1xf32>
    %4 = vector.shape_cast %3 : vector<1x8x1xf32> to vector<8x1xf32>
    %5 = vector.shape_cast %2 : vector<8x1xf32> to vector<1x8x1xf32>
    tpu.vector_store %arg3[%c0_1, %c0_2, %c0_3], %5 {strides = array<i32>} : memref<1x8x1xf32, #tpu.memory_space<vmem>>, vector<1x8x1xf32>,
    return
  }
  func.func @transform_0(%arg0: i32, %arg1: i32) -> (i32, i32) {
    %c0_i32 = arith.constant 0 : i32
    return %arg0, %arg1 : i32, i32
  }
  func.func @transform_1(%arg0: i32, %arg1: i32) -> (i32, i32, i32) {
    %c0_i32 = arith.constant 0 : i32
    %c0_i32_0 = arith.constant 0 : i32
    return %arg1, %arg0, %c0_i32 : i32, i32, i32
  }
}

</mosaic_0001>

<llo_original>
// kernel: tpu_custom_call.1
$region0: #{tpu_custom_call.1}
  #allocation0 [shape = 'u32[]', space=smem, size = 0x4, offset = 0x4, fixed_abs, tag = 'smem constant byte address 0x4 - core index']
  #allocation1 [shape = 'u32[144,128]{1,0:T(1,128)}', space=vmem, size = 0x12000, scoped, tag = 'internal scratch']
  %s0 = inlined_call_operand.hbm [shape: f32[8,256], index: 0, kind: input, shape index: {}]
  %s1 = inlined_call_operand.vmem [shape: f32[1,8,1], index: 1, kind: output, shape index: {}]
  %s2 = sld [smem:[#allocation0]]
  $region18: #{tpu_custom_call.1} parent=0
    _
  %s4 = ssub.s32 1, %s2
  %s5 = scalar_select 0, %s4, %s2
  $region1: #{tpu_custom_call.1} parent=0
    #allocation2 [shape = 'u8[8192]{0}', space=vmem, size = 0x2000, scoped, tag = 'input window, operand 0, single buffered']
    #allocation3 [shape = 's32[1]{0}', space=sflag, size = 0x4, scoped, tag = 'scoped memory for tpu_custom_call.1']
    %6 = vsyncpa [#allocation3], 0
    // Predicated region
    $region2: #{tpu_custom_call.1} parent=1 // pred_check
      _
    $region3: #{tpu_custom_call.1} parent=1 // pred_check_branch
      %8 = sbr.rel (0) target = $region5
    $region4: #{tpu_custom_call.1} parent=1 // pred_region
      %s10 = ssub.s32 256, 256
      %11 = vsyncadd [#allocation3], %s10
      %s13 = sshll.u32 [#allocation2], 4
      %s14 = int_to_ptr.vmem [resolvable:$true] %s13
      %16 = dma.hbm_to_vmem [thread:$0]  %s0, 256, %s14, [#allocation3]
    $region5: #{tpu_custom_call.1} parent=1 // pred_fallthru
      _
    // Predicated region
    $region6: #{tpu_custom_call.1} parent=1 // pred_check
      _
    $region7: #{tpu_custom_call.1} parent=1 // pred_check_branch
      %18 = sbr.rel (0) target = $region9
    $region8: #{tpu_custom_call.1} parent=1 // pred_region
      %19 = dma.done [#allocation3], 256
    $region9: #{tpu_custom_call.1} parent=1 // pred_fallthru
      _
    %v20 = vld [vmem:[#allocation2] sm:$0xff]
    %v21 = vld [vmem:[#allocation2 + $0x8] sm:$0xff]
    %v22 = vadd.f32 %v20, %v21
    %23 = vadd.xlane.f32.xlu0 %v22
    %v24 = vpop.xlane.xlu0 %23
    %vm25 = vcmask 7168
    %26 = vst.msk [vmem:[%s1] sm:$0xff] %vm25, %v24
    // Predicated region
    $region10: #{tpu_custom_call.1} parent=1 // pred_check
      _
    $region11: #{tpu_custom_call.1} parent=1 // pred_check_branch
      %28 = sbr.rel (0) target = $region13
    $region12: #{tpu_custom_call.1} parent=1 // pred_region
      _
    $region13: #{tpu_custom_call.1} parent=1 // pred_fallthru
      _
    // Predicated region
    $region14: #{tpu_custom_call.1} parent=1 // pred_check
      _
    $region15: #{tpu_custom_call.1} parent=1 // pred_check_branch
      %30 = sbr.rel (0) target = $region17
    $region16: #{tpu_custom_call.1} parent=1 // pred_region
      _
    $region17: #{tpu_custom_call.1} parent=1 // pred_fallthru
      _
    %31 = vsyncpa [#allocation3], 1

</llo_original>
